<compile_context>
chip_gen: v5e
topology: v5e:2x2
jax: 0.10.0
libtpu: 0.0.40
codegen_flags: <defaults>
</compile_context>

<pallas_src>
import math

import jax
import jax.numpy as jnp
from jax import lax
from jax.experimental import pallas as pl
from jax.experimental.pallas import tpu as pltpu


def _cosnorm_kernel(x_ref, w_ref, rowfac_ref, colfac_ref, o_ref, acc_ref):
    # x_ref: (tm, tk)  w_ref: (tn, tk)   (both compute_dtype, e.g. bf16)
    # rowfac_ref: (tm, 1) f32   colfac_ref: (1, tn) f32
    # o_ref: (tm, tn)           acc_ref: (tm, tn) f32 scratch
    k = pl.program_id(2)

    @pl.when(k == 0)
    def _init():
        acc_ref[...] = jnp.zeros_like(acc_ref)

    # Contract the last dims of both operands (x @ w.T); MXU-native, no
    # in-kernel transpose. bf16 operands, f32 accumulation.
    acc_ref[...] += lax.dot_general(
        x_ref[...], w_ref[...],
        dimension_numbers=(((1,), (1,)), ((), ())),
        preferred_element_type=jnp.float32)

    @pl.when(k == pl.num_programs(2) - 1)
    def _finalize():
        # rowfac = scale / (1 + ||x_row||), colfac = 1 / ||w_row||  (f32 epilogue)
        o_ref[...] = (acc_ref[...] * rowfac_ref[...] * colfac_ref[...]
                      ).astype(o_ref.dtype)


def _round_up(v, m):
    return ((v + m - 1) // m) * m


def cosnorm_classifier(x, weight, scale=16.0, *,
                       block_m=256, block_n=512, block_k=512,
                       compute_dtype=jnp.bfloat16):
    """x: (B, in_dims), weight: (out_dims, in_dims) -> (B, out_dims)."""
    B, D = x.shape
    C, D2 = weight.shape
    assert D == D2
    out_dtype = x.dtype

    # ---- Precompute normalization factors once, in f32 (cheap, fused by XLA).
    x32 = x.astype(jnp.float32)
    w32 = weight.astype(jnp.float32)
    norm_x = jnp.sqrt(jnp.sum(x32 * x32, axis=1, keepdims=True))      # (B, 1)
    row_fac = jnp.float32(scale) / (1.0 + norm_x)                      # (B, 1)
    col_fac = lax.rsqrt(jnp.sum(w32 * w32, axis=1))[None, :]           # (1, C)
    # TODO(synk): for repeated inference, hoist col_fac (and the bf16 weight
    # cast) to parameter-init time so it is not recomputed per call.

    # ---- Lane/sublane aligned tiles; pad arrays up to tile multiples.
    in_bytes = jnp.dtype(compute_dtype).itemsize
    sub_align = 16 if in_bytes == 2 else 8
    tm = min(block_m, _round_up(B, sub_align))
    tn = min(block_n, _round_up(C, 128))
    tk = min(block_k, _round_up(D, 128))
    Bp, Cp, Dp = _round_up(B, tm), _round_up(C, tn), _round_up(D, tk)

    x_c = x.astype(compute_dtype)
    w_c = weight.astype(compute_dtype)
    if (Bp, Dp) != (B, D):
        x_c = jnp.pad(x_c, ((0, Bp - B), (0, Dp - D)))
    if (Cp, Dp) != (C, D):
        w_c = jnp.pad(w_c, ((0, Cp - C), (0, Dp - D)))
    if Bp != B:
        row_fac = jnp.pad(row_fac, ((0, Bp - B), (0, 0)))
    if Cp != C:
        col_fac = jnp.pad(col_fac, ((0, 0), (0, Cp - C)))  # zeros -> padded cols = 0

    grid = (Bp // tm, Cp // tn, Dp // tk)

    # Double-buffered input/output tiles + f32 accumulator; cap at 48 MiB so the
    # same config is safe under v7x's 64 MiB physical VMEM.
    out_bytes = jnp.dtype(out_dtype).itemsize
    footprint = (2 * (tm * tk * in_bytes + tn * tk * in_bytes
                      + tm * tn * out_bytes + tm * 4 + tn * 4)
                 + tm * tn * 4)
    vmem_limit = int(min(48 * 1024 * 1024,
                         max(32 * 1024 * 1024, 2 * footprint)))

    cost = pl.CostEstimate(
        flops=2 * Bp * Cp * Dp,
        transcendentals=0,
        bytes_accessed=(Bp * Dp * in_bytes * grid[1]      # x re-read per j tile
                        + Cp * Dp * in_bytes * grid[0]    # w re-read per i tile
                        + Bp * Cp * out_bytes),
    )

    out_p = pl.pallas_call(
        _cosnorm_kernel,
        out_shape=jax.ShapeDtypeStruct((Bp, Cp), out_dtype),
        grid_spec=pltpu.PrefetchScalarGridSpec(
            num_scalar_prefetch=0,
            grid=grid,
            in_specs=[
                pl.BlockSpec((tm, tk), lambda i, j, k: (i, k)),   # x tile
                pl.BlockSpec((tn, tk), lambda i, j, k: (j, k)),   # w tile (no transpose)
                pl.BlockSpec((tm, 1), lambda i, j, k: (i, 0)),    # row factor
                pl.BlockSpec((1, tn), lambda i, j, k: (0, j)),    # col factor
            ],
            out_specs=pl.BlockSpec((tm, tn), lambda i, j, k: (i, j)),
            scratch_shapes=[
                pltpu.VMEM((tm, tn), jnp.float32),                # matmul accumulator
            ],
        ),
        compiler_params=pltpu.CompilerParams(
            dimension_semantics=("parallel", "parallel", "arbitrary"),
            vmem_limit_bytes=vmem_limit,
        ),
        cost_estimate=cost,
    )(x_c, w_c, row_fac, col_fac)

    if (Bp, Cp) != (B, C):
        out_p = out_p[:B, :C]
    return out_p


def cosnorm_reference(x, weight, scale=16.0):
    norm_x = jnp.linalg.norm(x, axis=1, keepdims=True)
    ex = norm_x / (1.0 + norm_x) * (x / norm_x)
    ew = weight / jnp.linalg.norm(weight, axis=1, keepdims=True)
    return jnp.dot(scale * ex, ew.T, precision=lax.Precision.HIGHEST)


if __name__ == "__main__":
    scale = 16.0
    key = jax.random.PRNGKey(0)
    k1, k2, k3, k4 = jax.random.split(key, 4)

    # ---- Case 1: small, module-sized shapes (tiles fall back to padded extents).
    B1, D1, C1 = 8, 32, 16
    x1 = jax.random.normal(k1, (B1, D1), dtype=jnp.float32)
    stdv1 = 1.0 / math.sqrt(D1)
    w1 = jax.random.uniform(k2, (C1, D1), jnp.float32, minval=-stdv1, maxval=stdv1)
    ref1 = cosnorm_reference(x1, w1, scale=scale)

    # f32 compute path: exact check of kernel structure / padding / epilogue.
    out1_f32 = jax.block_until_ready(
        cosnorm_classifier(x1, w1, scale=scale, compute_dtype=jnp.float32))
    assert out1_f32.shape == (B1, C1)
    assert jnp.allclose(out1_f32, ref1, atol=1e-4, rtol=1e-4), "mismatch (small, f32)"

    # bf16 compute path (default): loose tolerance for bf16 MXU operands.
    out1 = jax.block_until_ready(cosnorm_classifier(x1, w1, scale=scale))
    assert out1.shape == (B1, C1)
    assert jnp.allclose(out1, ref1, atol=5e-2, rtol=5e-2), "mismatch (small, bf16)"

    # ---- Case 2: (2, 2, 2) grid exercising the accumulator + pipelining.
    B2, D2, C2 = 64, 256, 256
    x2 = jax.random.normal(k3, (B2, D2), dtype=jnp.float32)
    stdv2 = 1.0 / math.sqrt(D2)
    w2 = jax.random.uniform(k4, (C2, D2), jnp.float32, minval=-stdv2, maxval=stdv2)
    out2 = jax.block_until_ready(
        cosnorm_classifier(x2, w2, scale=scale,
                           block_m=32, block_n=128, block_k=128))
    ref2 = cosnorm_reference(x2, w2, scale=scale)
    assert out2.shape == (B2, C2)
    assert jnp.allclose(out2, ref2, atol=5e-2, rtol=5e-2), "mismatch (tiled, bf16)"

    print("KERNEL_OK")
</pallas_src>

<mosaic_0001>
module attributes {stable_mosaic.version = 11 : i64} {
  func.func @_cosnorm_kernel(%arg0: i32, %arg1: i32, %arg2: i32, %arg3: memref<8x128xf32, #tpu.memory_space<vmem>>, %arg4: memref<128x128xf32, #tpu.memory_space<vmem>>, %arg5: memref<8x1xf32, #tpu.memory_space<vmem>>, %arg6: memref<1x128xf32, #tpu.memory_space<vmem>>, %arg7: memref<8x128xf32, #tpu.memory_space<vmem>>, %arg8: memref<8x128xf32, #tpu.memory_space<vmem>>) attributes {dimension_semantics = [#tpu.dimension_semantics<parallel>, #tpu.dimension_semantics<parallel>, #tpu.dimension_semantics<arbitrary>], iteration_bounds = array<i64: 1, 1, 1>, scalar_prefetch = 0 : i64, scratch_operands = 1 : i64, tpu.core_type = #tpu.core_type<tc>, window_params = [{transform_indices = @transform_0, window_bounds = array<i64: 8, 128>}, {transform_indices = @transform_1, window_bounds = array<i64: 128, 128>}, {transform_indices = @transform_2, window_bounds = array<i64: 8, 1>}, {transform_indices = @transform_3, window_bounds = array<i64: 1, 128>}, {transform_indices = @transform_4, window_bounds = array<i64: 8, 128>}]} {
    %c0_i32 = arith.constant 0 : i32
    %0 = arith.cmpi eq, %arg2, %c0_i32 : i32
    %1 = arith.extui %0 : i1 to i32
    %c0_i32_0 = arith.constant 0 : i32
    %2 = arith.cmpi ne, %1, %c0_i32_0 : i32
    scf.if %2 {
      %cst_10 = arith.constant 0.000000e+00 : f32
      %12 = vector.broadcast %cst_10 : f32 to vector<8x128xf32>
      %c0_11 = arith.constant 0 : index
      %c0_12 = arith.constant 0 : index
      %13 = vector.load %arg8[%c0_11, %c0_12] : memref<8x128xf32, #tpu.memory_space<vmem>>, vector<8x128xf32>
      tpu.vector_store %arg8[%c0_11, %c0_12], %12 {strides = array<i32>} : memref<8x128xf32, #tpu.memory_space<vmem>>, vector<8x128xf32>,
    } else {
    }
    %c0 = arith.constant 0 : index
    %c0_1 = arith.constant 0 : index
    %3 = vector.load %arg8[%c0, %c0_1] : memref<8x128xf32, #tpu.memory_space<vmem>>, vector<8x128xf32>
    %c0_2 = arith.constant 0 : index
    %c0_3 = arith.constant 0 : index
    %4 = vector.load %arg3[%c0_2, %c0_3] : memref<8x128xf32, #tpu.memory_space<vmem>>, vector<8x128xf32>
    %c0_4 = arith.constant 0 : index
    %c0_5 = arith.constant 0 : index
    %5 = vector.load %arg4[%c0_4, %c0_5] : memref<128x128xf32, #tpu.memory_space<vmem>>, vector<128x128xf32>
    %cst = arith.constant dense<0.000000e+00> : vector<8x128xf32>
    %6 = tpu.matmul %4, %5, %cst {dimension_numbers = #tpu.dot_dimension_numbers<[1], [1], [0], [0], [0, 0, 1, 0], [], []>} : vector<8x128xf32>, vector<128x128xf32>, vector<8x128xf32> -> vector<8x128xf32>
    %7 = arith.addf %3, %6 : vector<8x128xf32>
    %c0_6 = arith.constant 0 : index
    %c0_7 = arith.constant 0 : index
    %8 = vector.load %arg8[%c0_6, %c0_7] : memref<8x128xf32, #tpu.memory_space<vmem>>, vector<8x128xf32>
    tpu.vector_store %arg8[%c0_6, %c0_7], %7 {strides = array<i32>} : memref<8x128xf32, #tpu.memory_space<vmem>>, vector<8x128xf32>,
    %c0_i32_8 = arith.constant 0 : i32
    %9 = arith.cmpi eq, %arg2, %c0_i32_8 : i32
    %10 = arith.extui %9 : i1 to i32
    %c0_i32_9 = arith.constant 0 : i32
    %11 = arith.cmpi ne, %10, %c0_i32_9 : i32
    scf.if %11 {
      %c0_10 = arith.constant 0 : index
      %c0_11 = arith.constant 0 : index
      %12 = vector.load %arg8[%c0_10, %c0_11] : memref<8x128xf32, #tpu.memory_space<vmem>>, vector<8x128xf32>
      %c0_12 = arith.constant 0 : index
      %c0_13 = arith.constant 0 : index
      %13 = vector.load %arg5[%c0_12, %c0_13] : memref<8x1xf32, #tpu.memory_space<vmem>>, vector<8x1xf32>
      %14 = vector.broadcast %13 : vector<8x1xf32> to vector<8x128xf32>
      %15 = arith.mulf %12, %14 : vector<8x128xf32>
      %c0_14 = arith.constant 0 : index
      %c0_15 = arith.constant 0 : index
      %16 = vector.load %arg6[%c0_14, %c0_15] : memref<1x128xf32, #tpu.memory_space<vmem>>, vector<1x128xf32>
      %17 = vector.broadcast %16 : vector<1x128xf32> to vector<8x128xf32>
      %18 = arith.mulf %15, %17 : vector<8x128xf32>
      %c0_16 = arith.constant 0 : index
      %c0_17 = arith.constant 0 : index
      %19 = vector.load %arg7[%c0_16, %c0_17] : memref<8x128xf32, #tpu.memory_space<vmem>>, vector<8x128xf32>
      tpu.vector_store %arg7[%c0_16, %c0_17], %18 {strides = array<i32>} : memref<8x128xf32, #tpu.memory_space<vmem>>, vector<8x128xf32>,
    } else {
    }
    return
  }
  func.func @transform_0(%arg0: i32, %arg1: i32, %arg2: i32) -> (i32, i32) {
    %c0_i32 = arith.constant 0 : i32
    return %arg0, %arg2 : i32, i32
  }
  func.func @transform_1(%arg0: i32, %arg1: i32, %arg2: i32) -> (i32, i32) {
    %c0_i32 = arith.constant 0 : i32
    return %arg1, %arg2 : i32, i32
  }
  func.func @transform_2(%arg0: i32, %arg1: i32, %arg2: i32) -> (i32, i32) {
    %c0_i32 = arith.constant 0 : i32
    %c0_i32_0 = arith.constant 0 : i32
    return %arg0, %c0_i32 : i32, i32
  }
  func.func @transform_3(%arg0: i32, %arg1: i32, %arg2: i32) -> (i32, i32) {
    %c0_i32 = arith.constant 0 : i32
    %c0_i32_0 = arith.constant 0 : i32
    return %c0_i32, %arg1 : i32, i32
  }
  func.func @transform_4(%arg0: i32, %arg1: i32, %arg2: i32) -> (i32, i32) {
    %c0_i32 = arith.constant 0 : i32
    return %arg0, %arg1 : i32, i32
  }
}

</mosaic_0001>

<llo_original>
// kernel: tpu_custom_call.1
$region0: #{tpu_custom_call.1}
  #allocation0 [shape = 'u32[]', space=smem, size = 0x4, offset = 0x4, fixed_abs, tag = 'smem constant byte address 0x4 - core index']
  #allocation1 [shape = 'u32[72,128]{1,0:T(1,128)}', space=vmem, size = 0x9000, scoped, tag = 'internal scratch']
  #allocation2 [shape = 'f32[8,128]{1,0:T(8,128)}', space=vmem, size = 0x1000, scoped, tag = 'scratch operand']
  %s0 = inlined_call_operand.vmem [shape: f32[8,128], index: 0, kind: input, shape index: {}]
  %s1 = inlined_call_operand.hbm [shape: f32[128,128], index: 1, kind: input, shape index: {}]
  %s2 = inlined_call_operand.vmem [shape: f32[8,1], index: 2, kind: input, shape index: {}]
  %s3 = inlined_call_operand.vmem [shape: f32[1,128], index: 3, kind: input, shape index: {}]
  %s4 = inlined_call_operand.hbm [shape: f32[8,128], index: 4, kind: output, shape index: {}]
  %s5 = sld [smem:[#allocation0]]
  $region38: #{tpu_custom_call.1} parent=0
    _
  %s7 = ssub.s32 1, %s5
  %s8 = scalar_select 0, %s7, %s5
  $region1: #{tpu_custom_call.1} parent=0
    #allocation3 [shape = 'u8[65536]{0}', space=vmem, size = 0x10000, scoped, tag = 'input window, operand 1, single buffered']
    #allocation4 [shape = 's32[1]{0}', space=sflag, size = 0x4, scoped, tag = 'scoped memory for tpu_custom_call.1']
    #allocation5 [shape = 's32[1]{0}', space=sflag, size = 0x4, scoped, tag = 'scoped memory for tpu_custom_call.1']
    #allocation6 [shape = 'u8[4096]{0}', space=vmem, size = 0x1000, scoped, tag = 'output window, operand 0, single buffered']
    %9 = vsyncpa [#allocation4], 0
    %10 = vsyncpa [#allocation5], 0
    // Predicated region
    $region2: #{tpu_custom_call.1} parent=1 // pred_check
      _
    $region3: #{tpu_custom_call.1} parent=1 // pred_check_branch
      %12 = sbr.rel (0) target = $region5
    $region4: #{tpu_custom_call.1} parent=1 // pred_region
      _
    $region5: #{tpu_custom_call.1} parent=1 // pred_fallthru
      _
    // Predicated region
    $region6: #{tpu_custom_call.1} parent=1 // pred_check
      _
    $region7: #{tpu_custom_call.1} parent=1 // pred_check_branch
      %14 = sbr.rel (0) target = $region9
    $region8: #{tpu_custom_call.1} parent=1 // pred_region
      %16 = vsyncadd [#allocation4], 0
      %s17 = sshll.u32 %s1, 4
      %s18 = int_to_ptr.hbm [resolvable:$true] %s17
      %s19 = sshll.u32 [#allocation3], 4
      %s20 = int_to_ptr.vmem [resolvable:$true] %s19
      %25 = dma.hbm_to_vmem [thread:$0]  %s18, 2048, %s20, [#allocation4], 128, 128, 8
    $region9: #{tpu_custom_call.1} parent=1 // pred_fallthru
      _
    // Predicated region
    $region10: #{tpu_custom_call.1} parent=1 // pred_check
      _
    $region11: #{tpu_custom_call.1} parent=1 // pred_check_branch
      %27 = sbr.rel (0) target = $region13
    $region12: #{tpu_custom_call.1} parent=1 // pred_region
      _
    $region13: #{tpu_custom_call.1} parent=1 // pred_fallthru
      _
    // Predicated region
    $region14: #{tpu_custom_call.1} parent=1 // pred_check
      _
    $region15: #{tpu_custom_call.1} parent=1 // pred_check_branch
      %29 = sbr.rel (0) target = $region17
    $region16: #{tpu_custom_call.1} parent=1 // pred_region
      _
    $region17: #{tpu_custom_call.1} parent=1 // pred_fallthru
      _
    // Predicated region
    $region18: #{tpu_custom_call.1} parent=1 // pred_check
      _
    $region19: #{tpu_custom_call.1} parent=1 // pred_check_branch
      %31 = sbr.rel (0) target = $region21
    $region20: #{tpu_custom_call.1} parent=1 // pred_region
      %33 = dma.done [#allocation4], 2048
    $region21: #{tpu_custom_call.1} parent=1 // pred_fallthru
      _
    %p34 = scmp.eq.s32.totalorder 0, 0
    // Predicated region
    $region22: #{tpu_custom_call.1} parent=1 // pred_check
      %p35 = pneg %p34
    $region23: #{tpu_custom_call.1} parent=1 // pred_check_branch
      %37 = sbr.rel (%p35) target = $region25
    $region24: #{tpu_custom_call.1} parent=1 // pred_region
      %38 = vst [vmem:[#allocation2] sm:$0xff] 0.0
    $region25: #{tpu_custom_call.1} parent=1 // pred_fallthru
      _
    %v39 = vld [vmem:[#allocation2] sm:$0xff]
    %v40 = vld [vmem:[%s0] sm:$0xff]
    %v41 = vld [vmem:[#allocation3] sm:$0xff]
    %v42 = vld [vmem:[#allocation3 + $0x8] sm:$0xff]
    %v43 = vld [vmem:[#allocation3 + $0x10] sm:$0xff]
    %v44 = vld [vmem:[#allocation3 + $0x18] sm:$0xff]
    %v45 = vld [vmem:[#allocation3 + $0x20] sm:$0xff]
    %v46 = vld [vmem:[#allocation3 + $0x28] sm:$0xff]
    %v47 = vld [vmem:[#allocation3 + $0x30] sm:$0xff]
    %v48 = vld [vmem:[#allocation3 + $0x38] sm:$0xff]
    %v49 = vld [vmem:[#allocation3 + $0x40] sm:$0xff]
    %v50 = vld [vmem:[#allocation3 + $0x48] sm:$0xff]
    %v51 = vld [vmem:[#allocation3 + $0x50] sm:$0xff]
    %v52 = vld [vmem:[#allocation3 + $0x58] sm:$0xff]
    %v53 = vld [vmem:[#allocation3 + $0x60] sm:$0xff]
    %v54 = vld [vmem:[#allocation3 + $0x68] sm:$0xff]
    %v55 = vld [vmem:[#allocation3 + $0x70] sm:$0xff]
    %v56 = vld [vmem:[#allocation3 + $0x78] sm:$0xff]
    %57 = vmatpush.xpose.msra.mxu0 %v56
    %58 = vmatpush.xpose.msra.mxu0 %v55
    %59 = vmatpush.xpose.msra.mxu0 %v54
    %60 = vmatpush.xpose.msra.mxu0 %v53
    %61 = vmatpush.xpose.msra.mxu0 %v52
    %62 = vmatpush.xpose.msra.mxu0 %v51
    %63 = vmatpush.xpose.msra.mxu0 %v50
    %64 = vmatpush.xpose.msra.mxu0 %v49
    %65 = vmatpush.xpose.msra.mxu0 %v48
    %66 = vmatpush.xpose.msra.mxu0 %v47
    %67 = vmatpush.xpose.msra.mxu0 %v46
    %68 = vmatpush.xpose.msra.mxu0 %v45
    %69 = vmatpush.xpose.msra.mxu0 %v44
    %70 = vmatpush.xpose.msra.mxu0 %v43
    %71 = vmatpush.xpose.msra.mxu0 %v42
    %72 = vmatpush.xpose.msra.mxu0 %v41
    %73 = vmatmul.f32.gmra.mxu0 %v40
    %v74 = vpop.f32.mrf.mxu0
    %v75 = vadd.f32 0.0, %v74
    %76 = vdwg.mxu0
    %v77 = vadd.f32 %v39, %v75
    %78 = vst [vmem:[#allocation2] sm:$0xff] %v77
    // Predicated region
    $region26: #{tpu_custom_call.1} parent=1 // pred_check
      %p79 = pneg %p34
    $region27: #{tpu_custom_call.1} parent=1 // pred_check_branch
      %81 = sbr.rel (%p79) target = $region29
    $region28: #{tpu_custom_call.1} parent=1 // pred_region
      %v82 = vld [vmem:[#allocation2] sm:$0xff]
      %v83 = vld [vmem:[%s2] sm:$0xff]
      %85 = vset.pattern.permute.xlu0 0
      %86 = vperm.xlu0 %85, %v83
      %v87 = vpop.permute.xlu0 %86
      %v89 = vmul.f32 %v82, %v87
      %v90 = vld [vmem:[%s3] sm:$0x1]
      %v92 = vperm.slane %v90, 0
      %v94 = vmul.f32 %v89, %v92
      %95 = vst [vmem:[#allocation6] sm:$0xff] %v94
    $region29: #{tpu_custom_call.1} parent=1 // pred_fallthru
      _
    // Predicated region
    $region30: #{tpu_custom_call.1} parent=1 // pred_check
      _
    $region31: #{tpu_custom_call.1} parent=1 // pred_check_branch
      %97 = sbr.rel (0) target = $region33
    $region32: #{tpu_custom_call.1} parent=1 // pred_region
      %99 = vsyncadd [#allocation5], 0
      %s101 = sshll.u32 [#allocation6], 4
      %s102 = int_to_ptr.vmem [resolvable:$true] %s101
      %s103 = sshll.u32 %s4, 4
      %s104 = int_to_ptr.hbm [resolvable:$true] %s103
      %106 = dma.vmem_to_hbm [thread:$0]  %s102, 128, %s104, [#allocation5]
    $region33: #{tpu_custom_call.1} parent=1 // pred_fallthru
      _
    // Predicated region
    $region34: #{tpu_custom_call.1} parent=1 // pred_check
      _
    $region35: #{tpu_custom_call.1} parent=1 // pred_check_branch
      %108 = sbr.rel (0) target = $region37
    $region36: #{tpu_custom_call.1} parent=1 // pred_region
      %110 = dma.done [#allocation5], 128
    $region37: #{tpu_custom_call.1} parent=1 // pred_fallthru
      _
    %111 = vsyncpa [#allocation4], 1
    %112 = vsyncpa [#allocation5], 1

</llo_original>
